<compile_context>
chip_gen: v7x
topology: tpu7x:2x2x1
jax: 0.10.0
libtpu: 0.0.40
codegen_flags: <defaults>
</compile_context>

<pallas_src>
import functools

import jax
import jax.numpy as jnp
from jax.experimental import pallas as pl
from jax.experimental.pallas import tpu as pltpu

HIDDEN = 10            # layer1 output width (before the 3-way feature expansion)
DEFAULT_TILE_B = 4096  # lane-dense batch tile (64 KiB of x per tile at D=4)


def _round_up(n, m):
    return ((n + m - 1) // m) * m


def _eql_kernel(xt_ref, w1_ref, w2_ref, b2_ref, o_ref):
    # xt_ref : (D, TILE_B)  f32   batch on lanes
    # w1_ref : (H, D)       f32
    # w2_ref : (H, 3)       f32   columns = [a | b | c] for [z | sin z | z^2]
    # b2_ref : (1,)         f32   SMEM scalar
    # o_ref  : (1, TILE_B)  f32
    xt = xt_ref[...]
    w1 = w1_ref[...]
    z = jnp.dot(w1, xt, preferred_element_type=jnp.float32)      # (H, TILE_B) MXU

    w2 = w2_ref[...]                                             # (H, 3)
    a = w2[:, 0:1]                                               # (H, 1)
    b = w2[:, 1:2]
    c = w2[:, 2:3]

    # Folded concat + final linear: pure VPU FMAs + EUP sin + XLU sublane sum.
    contrib = a * z + b * jnp.sin(z) + c * (z * z)               # (H, TILE_B)
    out = jnp.sum(contrib, axis=0, keepdims=True)                # (1, TILE_B)
    o_ref[...] = out + b2_ref[0]


@functools.partial(jax.jit, static_argnames=("tile_b",))
def eql_forward(x, w1, w2, b2, *, tile_b=DEFAULT_TILE_B):
    """x: (B, D) f32.  w1: (10, D) torch layout.  w2: (1, 30).  b2: (1,)."""
    B, D = x.shape
    H = w1.shape[0]

    # Lane-dense tiling of the batch. Tail rows are zero-padded; their output
    # is discarded in the wrapper (no in-kernel reduction over padded rows).
    tb = min(tile_b, _round_up(max(B, 1), 128))
    b_pad = _round_up(B, tb)
    num_tiles = b_pad // tb

    xt = jnp.zeros((D, b_pad), jnp.float32).at[:, :B].set(
        jnp.transpose(x).astype(jnp.float32))
    # W2 is (1, 3H) laid out [a_0..a_{H-1}, b_0.., c_0..]; pack to (H, 3).
    w2_packed = jnp.transpose(w2.reshape(3, H)).astype(jnp.float32)   # (H, 3)
    b2_1d = b2.reshape(1).astype(jnp.float32)

    out = pl.pallas_call(
        _eql_kernel,
        out_shape=jax.ShapeDtypeStruct((1, b_pad), jnp.float32),
        grid=(num_tiles,),
        in_specs=[
            pl.BlockSpec((D, tb), lambda i: (0, i)),                      # x^T tile
            pl.BlockSpec((H, D), lambda i: (0, 0)),                       # W1 (whole)
            pl.BlockSpec((H, 3), lambda i: (0, 0)),                       # W2 packed
            pl.BlockSpec((1,), lambda i: (0,), memory_space=pltpu.SMEM),  # bias
        ],
        out_specs=pl.BlockSpec((1, tb), lambda i: (0, i)),
        compiler_params=pltpu.CompilerParams(
            dimension_semantics=("parallel",),
        ),
        cost_estimate=pl.CostEstimate(
            flops=2 * B * D * H + 6 * B * H,
            transcendentals=B * H,
            bytes_accessed=B * D * 4 + B * 4 + (H * D + 3 * H + 1) * 4,
        ),
    )(xt, w1.astype(jnp.float32), w2_packed, b2_1d)

    return out[0, :B]                                            # squeeze(-1) -> (B,)


def eql_forward_ref(x, w1, w2, b2):
    """Pure-JAX reference mirroring the PyTorch code literally."""
    z = x @ w1.T
    h = jnp.concatenate([z, jnp.sin(z), z ** 2], axis=1)
    return (h @ w2.T + b2)[:, 0]


if __name__ == "__main__":
    key = jax.random.PRNGKey(0)
    k_x, k_w1, k_w2, k_b2, k_x2 = jax.random.split(key, 5)

    B, INPUT_DIM = 8, 4

    x = jax.random.normal(k_x, (B, INPUT_DIM), dtype=jnp.float32)

    # Deterministic parameter init (PyTorch-style uniform bounds).
    bound1 = 1.0 / jnp.sqrt(jnp.float32(INPUT_DIM))
    w1 = jax.random.uniform(k_w1, (HIDDEN, INPUT_DIM), jnp.float32, -bound1, bound1)
    bound2 = 1.0 / jnp.sqrt(jnp.float32(3 * HIDDEN))
    w2 = jax.random.uniform(k_w2, (1, 3 * HIDDEN), jnp.float32, -bound2, bound2)
    b2 = jax.random.uniform(k_b2, (1,), jnp.float32, -bound2, bound2)

    # Small single-tile case.
    out = jax.block_until_ready(eql_forward(x, w1, w2, b2))
    ref = eql_forward_ref(x, w1, w2, b2)
    assert out.shape == (B,), out.shape
    assert jnp.allclose(out, ref, atol=1e-4, rtol=1e-4), (out, ref)

    # Ragged multi-tile case (exercises grid pipelining + tail padding).
    B2 = 520
    x2 = jax.random.normal(k_x2, (B2, INPUT_DIM), dtype=jnp.float32)
    out2 = jax.block_until_ready(eql_forward(x2, w1, w2, b2, tile_b=128))
    ref2 = eql_forward_ref(x2, w1, w2, b2)
    assert out2.shape == (B2,), out2.shape
    assert jnp.allclose(out2, ref2, atol=1e-4, rtol=1e-4)

    print("KERNEL_OK")
</pallas_src>

<mosaic_0001>
module attributes {stable_mosaic.version = 11 : i64} {
  func.func @_eql_kernel(%arg0: i32, %arg1: memref<4x128xf32, #tpu.memory_space<vmem>>, %arg2: memref<10x4xf32, #tpu.memory_space<vmem>>, %arg3: memref<10x3xf32, #tpu.memory_space<vmem>>, %arg4: memref<1xf32, #tpu.memory_space<smem>>, %arg5: memref<1x128xf32, #tpu.memory_space<vmem>>) attributes {dimension_semantics = [#tpu.dimension_semantics<parallel>], iteration_bounds = array<i64: 1>, scalar_prefetch = 0 : i64, scratch_operands = 0 : i64, tpu.core_type = #tpu.core_type<tc>, window_params = [{transform_indices = @transform_0, window_bounds = array<i64: 4, 128>}, {pipeline_mode = #tpu.pipeline_mode<synchronous>, transform_indices = @transform_1, window_bounds = array<i64: 10, 4>}, {pipeline_mode = #tpu.pipeline_mode<synchronous>, transform_indices = @transform_2, window_bounds = array<i64: 10, 3>}, {transform_indices = @transform_3, window_bounds = array<i64: 1>}, {transform_indices = @transform_4, window_bounds = array<i64: 1, 128>}]} {
    %c0 = arith.constant 0 : index
    %c0_0 = arith.constant 0 : index
    %0 = vector.load %arg1[%c0, %c0_0] : memref<4x128xf32, #tpu.memory_space<vmem>>, vector<4x128xf32>
    %c0_1 = arith.constant 0 : index
    %c0_2 = arith.constant 0 : index
    %1 = vector.load %arg2[%c0_1, %c0_2] : memref<10x4xf32, #tpu.memory_space<vmem>>, vector<10x4xf32>
    %cst = arith.constant dense<0.000000e+00> : vector<10x128xf32>
    %2 = tpu.matmul %1, %0, %cst {dimension_numbers = #tpu.dot_dimension_numbers<[1], [0], [0], [1], [0, 0, 1, 1], [], []>} : vector<10x4xf32>, vector<4x128xf32>, vector<10x128xf32> -> vector<10x128xf32>
    %c0_3 = arith.constant 0 : index
    %c0_4 = arith.constant 0 : index
    %3 = vector.load %arg3[%c0_3, %c0_4] : memref<10x3xf32, #tpu.memory_space<vmem>>, vector<10x3xf32>
    %4 = vector.extract_strided_slice %3 {offsets = [0, 0], sizes = [10, 1], strides = [1, 1]} : vector<10x3xf32> to vector<10x1xf32>
    %5 = vector.extract_strided_slice %3 {offsets = [0, 1], sizes = [10, 1], strides = [1, 1]} : vector<10x3xf32> to vector<10x1xf32>
    %6 = vector.extract_strided_slice %3 {offsets = [0, 2], sizes = [10, 1], strides = [1, 1]} : vector<10x3xf32> to vector<10x1xf32>
    %7 = vector.broadcast %4 : vector<10x1xf32> to vector<10x128xf32>
    %8 = arith.mulf %7, %2 : vector<10x128xf32>
    %9 = math.sin %2 : vector<10x128xf32>
    %10 = vector.broadcast %5 : vector<10x1xf32> to vector<10x128xf32>
    %11 = arith.mulf %10, %9 : vector<10x128xf32>
    %12 = arith.addf %8, %11 : vector<10x128xf32>
    %13 = arith.mulf %2, %2 : vector<10x128xf32>
    %14 = vector.broadcast %6 : vector<10x1xf32> to vector<10x128xf32>
    %15 = arith.mulf %14, %13 : vector<10x128xf32>
    %16 = arith.addf %12, %15 : vector<10x128xf32>
    %cst_5 = arith.constant dense<0.000000e+00> : vector<128xf32>
    %17 = vector.multi_reduction <add>, %16, %cst_5 [0] : vector<10x128xf32> to vector<128xf32>
    %18 = vector.shape_cast %17 : vector<128xf32> to vector<1x128xf32>
    %c0_6 = arith.constant 0 : index
    %19 = memref.load %arg4[%c0_6] : memref<1xf32, #tpu.memory_space<smem>>
    %20 = vector.broadcast %19 : f32 to vector<1x128xf32>
    %21 = arith.addf %18, %20 : vector<1x128xf32>
    %c0_7 = arith.constant 0 : index
    %c0_8 = arith.constant 0 : index
    %22 = vector.load %arg5[%c0_7, %c0_8] : memref<1x128xf32, #tpu.memory_space<vmem>>, vector<1x128xf32>
    tpu.vector_store %arg5[%c0_7, %c0_8], %21 {strides = array<i32>} : memref<1x128xf32, #tpu.memory_space<vmem>>, vector<1x128xf32>,
    return
  }
  func.func @transform_0(%arg0: i32) -> (i32, i32) {
    %c0_i32 = arith.constant 0 : i32
    %c0_i32_0 = arith.constant 0 : i32
    return %c0_i32, %arg0 : i32, i32
  }
  func.func @transform_1(%arg0: i32) -> (i32, i32) {
    %c0_i32 = arith.constant 0 : i32
    %c0_i32_0 = arith.constant 0 : i32
    %c0_i32_1 = arith.constant 0 : i32
    return %c0_i32, %c0_i32_0 : i32, i32
  }
  func.func @transform_2(%arg0: i32) -> (i32, i32) {
    %c0_i32 = arith.constant 0 : i32
    %c0_i32_0 = arith.constant 0 : i32
    %c0_i32_1 = arith.constant 0 : i32
    return %c0_i32, %c0_i32_0 : i32, i32
  }
  func.func @transform_3(%arg0: i32) -> i32 {
    %c0_i32 = arith.constant 0 : i32
    %c0_i32_0 = arith.constant 0 : i32
    return %c0_i32 : i32
  }
  func.func @transform_4(%arg0: i32) -> (i32, i32) {
    %c0_i32 = arith.constant 0 : i32
    %c0_i32_0 = arith.constant 0 : i32
    return %c0_i32, %arg0 : i32, i32
  }
}

</mosaic_0001>

<llo_original>
// kernel: eql_forward.1
$region0: #{eql_forward.1}
  #allocation0 [shape = 'u32[]', space=smem, size = 0x4, offset = 0x4, fixed_abs, tag = 'smem constant byte address 0x4 - core index']
  #allocation1 [shape = 'u32[144,128]{1,0:T(1,128)}', space=vmem, size = 0x12000, scoped, tag = 'internal scratch']
  #allocation2 [shape = 'f32[1]{0:T(128)S(6)}', space=smem, size = 0x200, scoped, tag = 'scoped memory for eql_forward.1']
  %s0 = inlined_call_operand.vmem [shape: f32[4,128], index: 0, kind: input, shape index: {}]
  %s1 = inlined_call_operand.vmem [shape: f32[10,4], index: 1, kind: input, shape index: {}]
  %s2 = inlined_call_operand.vmem [shape: f32[10,3], index: 2, kind: input, shape index: {}]
  %s3 = inlined_call_operand.<no memory space> [shape: f32[1], index: 3, kind: input, shape index: {}]
  %s4 = inlined_call_operand.vmem [shape: f32[1,128], index: 4, kind: output, shape index: {}]
  %s5 = sld [smem:[#allocation0]]
  $region26: #{eql_forward.1} parent=0
    _
  %s7 = ssub.s32 1, %s5
  %s8 = scalar_select 0, %s7, %s5
  %9 = sst [smem:[#allocation2]] %s3
  // Predicated region
  $region2: #{eql_forward.1} parent=0 // pred_check
    _
  $region3: #{eql_forward.1} parent=0 // pred_check_branch
    %11 = sbr.rel (0) target = $region5
  $region4: #{eql_forward.1} parent=0 // pred_region
    _
  $region5: #{eql_forward.1} parent=0 // pred_fallthru
    _
  // Predicated region
  $region6: #{eql_forward.1} parent=0 // pred_check
    _
  $region7: #{eql_forward.1} parent=0 // pred_check_branch
    %13 = sbr.rel (0) target = $region9
  $region8: #{eql_forward.1} parent=0 // pred_region
    _
  $region9: #{eql_forward.1} parent=0 // pred_fallthru
    _
  // Predicated region
  $region10: #{eql_forward.1} parent=0 // pred_check
    _
  $region11: #{eql_forward.1} parent=0 // pred_check_branch
    %15 = sbr.rel (0) target = $region13
  $region12: #{eql_forward.1} parent=0 // pred_region
    _
  $region13: #{eql_forward.1} parent=0 // pred_fallthru
    _
  // Predicated region
  $region14: #{eql_forward.1} parent=0 // pred_check
    _
  $region15: #{eql_forward.1} parent=0 // pred_check_branch
    %17 = sbr.rel (0) target = $region17
  $region16: #{eql_forward.1} parent=0 // pred_region
    _
  $region17: #{eql_forward.1} parent=0 // pred_fallthru
    _
  %v18 = vld [vmem:[%s0] sm:$0xf]
  %v19 = vld [vmem:[%s1] sm:$0xff]
  %v20 = vld [vmem:[%s1 + $0x8] sm:$0x3]
  %vm21 = vcmask 31744
  %v23 = vsel %vm21, %v19, 0
  %v26 = vsel %vm21, %v20, 0
  %vm28 = vcmask 1043456
  %v30 = vsel %vm28, %v18, 0
  %32 = vmatprep.subr.mxu0 0.0
  %33 = vmatpush1.msra.mxu0 %v30
  %34 = vmatprep.subr.mxu0 0.0
  %35 = vmatpush1.msra.mxu0 0.0
  %36 = vmatprep.subr.mxu0 0.0
  %37 = vmatpush1.msra.mxu0 0.0
  %38 = vmatprep.subr.mxu0 0.0
  %39 = vmatpush1.msra.mxu0 0.0
  %40 = vmatprep.subr.mxu0 0.0
  %41 = vmatpush1.msra.mxu0 0.0
  %42 = vmatprep.subr.mxu0 0.0
  %43 = vmatpush1.msra.mxu0 0.0
  %44 = vmatprep.subr.mxu0 0.0
  %45 = vmatpush1.msra.mxu0 0.0
  %46 = vmatprep.subr.mxu0 0.0
  %47 = vmatpush1.msra.mxu0 0.0
  %48 = vmatprep.subr.mxu0 0.0
  %49 = vmatpush1.msra.mxu0 0.0
  %50 = vmatprep.subr.mxu0 0.0
  %51 = vmatpush1.msra.mxu0 0.0
  %52 = vmatprep.subr.mxu0 0.0
  %53 = vmatpush1.msra.mxu0 0.0
  %54 = vmatprep.subr.mxu0 0.0
  %55 = vmatpush1.msra.mxu0 0.0
  %56 = vmatprep.subr.mxu0 0.0
  %57 = vmatpush1.msra.mxu0 0.0
  %58 = vmatprep.subr.mxu0 0.0
  %59 = vmatpush1.msra.mxu0 0.0
  %60 = vmatprep.subr.mxu0 0.0
  %61 = vmatpush1.msra.mxu0 0.0
  %62 = vmatprep.subr.mxu0 0.0
  %63 = vmatpush1.msra.mxu0 0.0
  %64 = vmatprep.subr.mxu0 0.0
  %65 = vmatpush1.msra.mxu0 0.0
  %66 = vmatprep.subr.mxu0 0.0
  %67 = vmatpush1.msra.mxu0 0.0
  %68 = vmatprep.subr.mxu0 0.0
  %69 = vmatpush1.msra.mxu0 0.0
  %70 = vmatprep.subr.mxu0 0.0
  %71 = vmatpush1.msra.mxu0 0.0
  %72 = vmatprep.subr.mxu0 0.0
  %73 = vmatpush1.msra.mxu0 0.0
  %74 = vmatprep.subr.mxu0 0.0
  %75 = vmatpush1.msra.mxu0 0.0
  %76 = vmatprep.subr.mxu0 0.0
  %77 = vmatpush1.msra.mxu0 0.0
  %78 = vmatprep.subr.mxu0 0.0
  %79 = vmatpush1.msra.mxu0 0.0
  %80 = vmatprep.subr.mxu0 0.0
  %81 = vmatpush1.msra.mxu0 0.0
  %82 = vmatprep.subr.mxu0 0.0
  %83 = vmatpush1.msra.mxu0 0.0
  %84 = vmatprep.subr.mxu0 0.0
  %85 = vmatpush1.msra.mxu0 0.0
  %86 = vmatprep.subr.mxu0 0.0
  %87 = vmatpush1.msra.mxu0 0.0
  %88 = vmatprep.subr.mxu0 0.0
  %89 = vmatpush1.msra.mxu0 0.0
  %90 = vmatprep.subr.mxu0 0.0
  %91 = vmatpush1.msra.mxu0 0.0
  %92 = vmatprep.subr.mxu0 0.0
  %93 = vmatpush1.msra.mxu0 0.0
  %94 = vmatprep.subr.mxu0 0.0
  %95 = vmatpush1.msra.mxu0 0.0
  %96 = vmatprep.mubr.f32.mxu0 0.0
  %97 = vmatmul.mubr.f32.gmra.mrb[0].mxu0 %v23
  %v98 = vpop.f32.mrb[0].mxu0
  %v99 = vadd.f32 0.0, %v98
  %v100 = vpop.f32.mrb[0].mxu0
  %101 = vmatprep.mubr.f32.mxu0 0.0
  %102 = vmatmul.mubr.f32.gmra.mrb[0].mxu0 %v26
  %v103 = vpop.f32.mrb[0].mxu0
  %v104 = vadd.f32 0.0, %v103
  %v105 = vpop.f32.mrb[0].mxu0
  %106 = vdwg.mxu0
  %v107 = vld [vmem:[%s2] sm:$0xff]
  %v108 = vld [vmem:[%s2 + $0x8] sm:$0x3]
  %110 = vset.pattern.permute.xlu0 0
  %111 = vperm.xlu0 %110, %v107
  %v112 = vpop.permute.xlu0 %111
  %115 = vset.pattern.permute.xlu0 0
  %116 = vperm.xlu0 %115, %v108
  %v117 = vpop.permute.xlu0 %116
  %v119 = vmul.f32 %v112, %v99
  %v120 = vmul.f32 %v117, %v104
  %v121 = vand.u32 2147483647, %v99
  %vm122 = vcmp.le.f32.partialorder %v121, 0.7853982
  %vm123 = vcmp.lt.s32.totalorder %v99, 0
  %v124 = vand.u32 %v99, 2139095040
  %v125 = vshrl.u32 %v124, 23
  %v126 = vsub.s32 %v125, 127
  %v127 = vand.u32 2147483647, %v99
  %v128 = vand.u32 %v127, 8388607
  %v129 = vor.u32 %v128, 8388608
  %v130 = vsub.s32 0, %v129
  %v131 = vadd.s32 %v126, 1
  %vm132 = vcmp.gt.s32.totalorder %v131, 0
  %v133 = vsel %vm132, %v131, 0
  %v134 = vshrl.u32 %v133, 5
  %v135 = vand.u32 %v133, 31
  %v136 = vsub.s32 32, %v135
  %v137 = vshrl.u32 683565275, %v136
  %v138 = vshll.u32 683565275, %v135
  %v139 = vshrl.u32 2475754826, %v136
  %v140 = vor.u32 %v138, %v139
  %v141 = vshll.u32 2475754826, %v135
  %v142 = vshrl.u32 2131351028, %v136
  %v143 = vor.u32 %v141, %v142
  %v144 = vshll.u32 2131351028, %v135
  %v145 = vshrl.u32 2102212464, %v136
  %v146 = vor.u32 %v144, %v145
  %v147 = vshll.u32 2102212464, %v135
  %v148 = vshrl.u32 920167782, %v136
  %v149 = vor.u32 %v147, %v148
  %v150 = vshll.u32 920167782, %v135
  %v151 = vshrl.u32 1326507024, %v136
  %v152 = vor.u32 %v150, %v151
  %vm153 = vcmp.lt.s32.totalorder %v134, 1
  %vm154 = vcmp.lt.s32.totalorder %v134, 2
  %vm155 = vcmp.lt.s32.totalorder %v134, 3
  %vm156 = vcmp.lt.s32.totalorder %v134, 4
  %v157 = vsel %vm153, %v137, %v140
  %v158 = vsel %vm156, %v146, 2102212464
  %v159 = vsel %vm155, %v143, %v158
  %v160 = vsel %vm154, %v157, %v159
  %v161 = vsel %vm153, %v140, %v143
  %v162 = vsel %vm156, %v149, 920167782
  %v163 = vsel %vm155, %v146, %v162
  %v164 = vsel %vm154, %v161, %v163
  %v165 = vsel %vm153, %v143, %v146
  %v166 = vsel %vm156, %v152, 1326507024
  %v167 = vsel %vm155, %v149, %v166
  %v168 = vsel %vm154, %v165, %v167
  %v169 = vshll.u32 %v129, 8
  %v170 = vmul.u32.u64.compose %v169, %v168
  %v171 = vextract.low.u32 %v170
  %v172 = vextract.high.u32 %v170
  %v173 = vmul.u32.u64.compose %v169, %v164
  %v174 = vextract.low.u32 %v173
  %v175 = vextract.high.u32 %v173
  %v176 = vmul.u32 %v169, %v160
  %v177 = vadd.s32 %v172, %v174
  %vm178 = vc.u32 %v172, %v174
  %v179 = vadd.s32 %v175, 1
  %v180 = vsel %vm178, %v179, %v175
  %v181 = vadd.s32 %v176, %v180
  %v182 = vadd.s32 %v181, 536870912
  %v183 = vshrl.u32 %v182, 30
  %v184 = vshll.u32 %v183, 30
  %v185 = vsub.s32 %v181, %v184
  %vm186 = vcmp.lt.s32.totalorder %v185, 0
  %v187 = vsub.s32 0, %v185
  %v188 = vsel %vm186, %v187, %v185
  %v189 = vclz %v188
  %v190 = vsub.s32 %v189, 2
  %vm191 = vcmp.gt.s32.totalorder 0, %v190
  %v192 = vsel %vm191, 0, %v190
  %v193 = vsub.s32 32, %v192
  %v194 = vshll.u32 %v185, %v192
  %v195 = vshrl.u32 %v177, %v193
  %v196 = vor.u32 %v194, %v195
  %v197 = vsub.s32 4294967266, %v192
  %v198 = vadd.s32 %v197, 127
  %v199 = vshll.u32 %v198, 23
  %v200 = vor.u32 4788187, %v199
  %v201 = vand.u32 2147483647, %v200
  %v203 = vcvt.s32.f32 %v196
  %v204 = vmul.f32 %v203, %v201
  %v205 = vxor.u32 %v204, 2147483648
  %v206 = vsel %vm123, %v205, %v204
  %v207 = vsub.s32 4, %v183
  %v208 = vsel %vm123, %v207, %v183
  %v209 = vsel %vm122, %v99, %v206
  %v210 = vsel %vm122, 0, %v208
  %v211 = vcosq.f32.pop %v209
  %v212 = vsinq.f32.pop %v209
  %vm213 = vweird.f32 %v99
  %v214 = vadd.s32 %v210, 3
  %v215 = vand.u32 %v214, 3
  %vm216 = vcmp.lt.s32.totalorder %v215, 2
  %vm217 = vcmp.eq.s32.totalorder %v215, 0
  %v218 = vxor.u32 %v212, 2147483648
  %v219 = vsel %vm217, %v211, %v218
  %vm220 = vcmp.eq.s32.totalorder %v215, 2
  %v221 = vxor.u32 %v211, 2147483648
  %v222 = vsel %vm220, %v221, %v212
  %v223 = vsel %vm216, %v219, %v222
  %v224 = vsel %vm213, nan, %v223
  %v225 = vand.u32 2147483647, %v104
  %vm226 = vcmp.le.f32.partialorder %v225, 0.7853982
  %vm227 = vcmp.lt.s32.totalorder %v104, 0
  %v228 = vand.u32 %v104, 2139095040
  %v229 = vshrl.u32 %v228, 23
  %v230 = vsub.s32 %v229, 127
  %v231 = vand.u32 2147483647, %v104
  %v232 = vand.u32 %v231, 8388607
  %v233 = vor.u32 %v232, 8388608
  %v234 = vsub.s32 0, %v233
  %v235 = vadd.s32 %v230, 1
  %vm236 = vcmp.gt.s32.totalorder %v235, 0
  %v237 = vsel %vm236, %v235, 0
  %v238 = vshrl.u32 %v237, 5
  %v239 = vand.u32 %v237, 31
  %v240 = vsub.s32 32, %v239
  %v241 = vshrl.u32 683565275, %v240
  %v242 = vshll.u32 683565275, %v239
  %v243 = vshrl.u32 2475754826, %v240
  %v244 = vor.u32 %v242, %v243
  %v245 = vshll.u32 2475754826, %v239
  %v246 = vshrl.u32 2131351028, %v240
  %v247 = vor.u32 %v245, %v246
  %v248 = vshll.u32 2131351028, %v239
  %v249 = vshrl.u32 2102212464, %v240
  %v250 = vor.u32 %v248, %v249
  %v251 = vshll.u32 2102212464, %v239
  %v252 = vshrl.u32 920167782, %v240
  %v253 = vor.u32 %v251, %v252
  %v254 = vshll.u32 920167782, %v239
  %v255 = vshrl.u32 1326507024, %v240
  %v256 = vor.u32 %v254, %v255
  %vm257 = vcmp.lt.s32.totalorder %v238, 1
  %vm258 = vcmp.lt.s32.totalorder %v238, 2
  %vm259 = vcmp.lt.s32.totalorder %v238, 3
  %vm260 = vcmp.lt.s32.totalorder %v238, 4
  %v261 = vsel %vm257, %v241, %v244
  %v262 = vsel %vm260, %v250, 2102212464
  %v263 = vsel %vm259, %v247, %v262
  %v264 = vsel %vm258, %v261, %v263
  %v265 = vsel %vm257, %v244, %v247
  %v266 = vsel %vm260, %v253, 920167782
  %v267 = vsel %vm259, %v250, %v266
  %v268 = vsel %vm258, %v265, %v267
  %v269 = vsel %vm257, %v247, %v250
  %v270 = vsel %vm260, %v256, 1326507024
  %v271 = vsel %vm259, %v253, %v270
  %v272 = vsel %vm258, %v269, %v271
  %v273 = vshll.u32 %v233, 8
  %v274 = vmul.u32.u64.compose %v273, %v272
  %v275 = vextract.low.u32 %v274
  %v276 = vextract.high.u32 %v274
  %v277 = vmul.u32.u64.compose %v273, %v268
  %v278 = vextract.low.u32 %v277
  %v279 = vextract.high.u32 %v277
  %v280 = vmul.u32 %v273, %v264
  %v281 = vadd.s32 %v276, %v278
  %vm282 = vc.u32 %v276, %v278
  %v283 = vadd.s32 %v279, 1
  %v284 = vsel %vm282, %v283, %v279
  %v285 = vadd.s32 %v280, %v284
  %v286 = vadd.s32 %v285, 536870912
  %v287 = vshrl.u32 %v286, 30
  %v288 = vshll.u32 %v287, 30
  %v289 = vsub.s32 %v285, %v288
  %vm290 = vcmp.lt.s32.totalorder %v289, 0
  %v291 = vsub.s32 0, %v289
  %v292 = vsel %vm290, %v291, %v289
  %v293 = vclz %v292
  %v294 = vsub.s32 %v293, 2
  %vm295 = vcmp.gt.s32.totalorder 0, %v294
  %v296 = vsel %vm295, 0, %v294
  %v297 = vsub.s32 32, %v296
  %v298 = vshll.u32 %v289, %v296
  %v299 = vshrl.u32 %v281, %v297
  %v300 = vor.u32 %v298, %v299
  %v301 = vsub.s32 4294967266, %v296
  %v302 = vadd.s32 %v301, 127
  %v303 = vshll.u32 %v302, 23
  %v304 = vor.u32 4788187, %v303
  %v305 = vand.u32 2147483647, %v304
  %v307 = vcvt.s32.f32 %v300
  %v308 = vmul.f32 %v307, %v305
  %v309 = vxor.u32 %v308, 2147483648
  %v310 = vsel %vm227, %v309, %v308
  %v311 = vsub.s32 4, %v287
  %v312 = vsel %vm227, %v311, %v287
  %v313 = vsel %vm226, %v104, %v310
  %v314 = vsel %vm226, 0, %v312
  %v315 = vcosq.f32.pop %v313
  %v316 = vsinq.f32.pop %v313
  %vm317 = vweird.f32 %v104
  %v318 = vadd.s32 %v314, 3
  %v319 = vand.u32 %v318, 3
  %vm320 = vcmp.lt.s32.totalorder %v319, 2
  %vm321 = vcmp.eq.s32.totalorder %v319, 0
  %v322 = vxor.u32 %v316, 2147483648
  %v323 = vsel %vm321, %v315, %v322
  %vm324 = vcmp.eq.s32.totalorder %v319, 2
  %v325 = vxor.u32 %v315, 2147483648
  %v326 = vsel %vm324, %v325, %v316
  %v327 = vsel %vm320, %v323, %v326
  %v328 = vsel %vm317, nan, %v327
  %329 = vset.pattern.permute.xlu0 1
  %330 = vperm.xlu0 %329, %v107
  %v331 = vpop.permute.xlu0 %330
  %333 = vset.pattern.permute.xlu0 1
  %334 = vperm.xlu0 %333, %v108
  %v335 = vpop.permute.xlu0 %334
  %v337 = vmul.f32 %v331, %v224
  %v338 = vmul.f32 %v335, %v328
  %v339 = vadd.f32 %v119, %v337
  %v340 = vadd.f32 %v120, %v338
  %v341 = vmul.f32 %v99, %v99
  %v342 = vmul.f32 %v104, %v104
  %343 = vset.pattern.permute.xlu0 2
  %344 = vperm.xlu0 %343, %v107
  %v345 = vpop.permute.xlu0 %344
  %347 = vset.pattern.permute.xlu0 2
  %348 = vperm.xlu0 %347, %v108
  %v349 = vpop.permute.xlu0 %348
  %v351 = vmul.f32 %v345, %v341
  %v352 = vmul.f32 %v349, %v342
  %v353 = vadd.f32 %v339, %v351
  %v354 = vadd.f32 %v340, %v352
  %vm355 = vcmask 1041408
  %v356 = vsel %vm355, %v354, 0.0
  %v357 = vadd.f32 %v353, %v356
  %v358 = vrot.slane %v357, 4
  %v359 = vadd.f32 %v357, %v358
  %v360 = vrot.slane %v359, 2
  %v361 = vadd.f32 %v359, %v360
  %v362 = vrot.slane %v361, 1
  %v363 = vadd.f32 %v361, %v362
  %s364 = sld [smem:[#allocation2]]
  %v365 = vstv %s364
  %v366 = vadd.f32 %v363, %v365
  %367 = vst [vmem:[%s4] sm:$0x1] %v366
  // Predicated region
  $region18: #{eql_forward.1} parent=0 // pred_check
    _
  $region19: #{eql_forward.1} parent=0 // pred_check_branch
    %369 = sbr.rel (0) target = $region21
  $region20: #{eql_forward.1} parent=0 // pred_region
    _
  $region21: #{eql_forward.1} parent=0 // pred_fallthru
    _
  // Predicated region
  $region22: #{eql_forward.1} parent=0 // pred_check
    _
  $region23: #{eql_forward.1} parent=0 // pred_check_branch
    %371 = sbr.rel (0) target = $region25
  $region24: #{eql_forward.1} parent=0 // pred_region
    _
  $region25: #{eql_forward.1} parent=0 // pred_fallthru
    _

</llo_original>
